<compile_context>
chip_gen: v7x
topology: tpu7x:2x2x1
jax: 0.10.0
libtpu: 0.0.40
codegen_flags: <defaults>
</compile_context>

<pallas_src>
import jax
import jax.numpy as jnp
from jax.experimental import pallas as pl
from jax.experimental.pallas import tpu as pltpu


def _pick_tile(dim, candidates=(512, 256, 128)):
    """Largest candidate that evenly divides `dim`, else the full dim."""
    for c in candidates:
        if dim >= c and dim % c == 0:
            return c
    return dim


def _parabit_kernel_single_k(x_ref, w_ref, b_ref, o_ref):
    # Whole reduction (feat_dim) fits in one tile: one matmul, direct store.
    # x_ref: (TM, K)  w_ref: (K, TN)  b_ref: (1, TN)  o_ref: (TM, TN)
    o_ref[...] = (
        jnp.dot(x_ref[...], w_ref[...], preferred_element_type=jnp.float32)
        + b_ref[...]
    ).astype(o_ref.dtype)


def _parabit_kernel_multi_k(x_ref, w_ref, b_ref, o_ref, acc_ref):
    # x_ref:   (TM, TK)   -- K-slice of the activations
    # w_ref:   (TK, TN)   -- (feat, seq*class) weight tile
    # b_ref:   (1, TN)    -- lane-dense bias tile (constant across K)
    # o_ref:   (TM, TN)   -- lane-dense output tile
    # acc_ref: (TM, TN)   -- fp32 accumulator across K tiles
    k = pl.program_id(2)

    @pl.when(k == 0)
    def _():
        acc_ref[...] = jnp.zeros_like(acc_ref)

    acc_ref[...] += jnp.dot(
        x_ref[...], w_ref[...], preferred_element_type=jnp.float32)

    @pl.when(k == pl.num_programs(2) - 1)
    def _():
        o_ref[...] = (acc_ref[...] + b_ref[...]).astype(o_ref.dtype)


def parabit_forward(x, weights, biases):
    """x: (batch, feat_dim); weights: (seq_len, feat_dim, class_num);
    biases: (seq_len, class_num)  ->  (seq_len, batch, class_num)."""
    seq_len, feat_dim, class_num = weights.shape
    batch = x.shape[0]
    n_total = seq_len * class_num

    # One-time layout plumbing in the wrapper (cheap, fused by XLA):
    # (seq, feat, class) -> (feat, seq*class); element order preserves
    # out[s, b, c] = x[b] @ weights[s, :, c] + biases[s, c].
    w_flat = jnp.transpose(weights, (1, 0, 2)).reshape(feat_dim, n_total)
    b_flat = biases.reshape(1, n_total)

    tm = _pick_tile(batch)       # batch tile (sublane dim of output)
    tn = _pick_tile(n_total)     # lane tile of collapsed N = seq*class
    tk = _pick_tile(feat_dim)    # reduction (feat_dim) tile

    mt, nt, kt = batch // tm, n_total // tn, feat_dim // tk

    itemsize = jnp.dtype(x.dtype).itemsize
    cost = pl.CostEstimate(
        flops=2 * batch * feat_dim * n_total,
        transcendentals=0,
        bytes_accessed=(x.size + w_flat.size + b_flat.size) * itemsize
        + batch * n_total * itemsize,
    )

    if kt == 1:
        # Single reduction tile: no accumulator scratch, all-parallel 2-D grid.
        out_flat = pl.pallas_call(
            _parabit_kernel_single_k,
            out_shape=jax.ShapeDtypeStruct((batch, n_total), x.dtype),
            grid_spec=pltpu.PrefetchScalarGridSpec(
                num_scalar_prefetch=0,
                grid=(mt, nt),
                in_specs=[
                    pl.BlockSpec((tm, feat_dim), lambda i, j: (i, 0)),
                    pl.BlockSpec((feat_dim, tn), lambda i, j: (0, j)),
                    pl.BlockSpec((1, tn), lambda i, j: (0, j)),
                ],
                out_specs=pl.BlockSpec((tm, tn), lambda i, j: (i, j)),
            ),
            compiler_params=pltpu.CompilerParams(
                dimension_semantics=("parallel", "parallel"),
            ),
            cost_estimate=cost,
        )(x, w_flat, b_flat)
    else:
        # Multi-K: fp32 accumulator resident across the K ("arbitrary") axis.
        out_flat = pl.pallas_call(
            _parabit_kernel_multi_k,
            out_shape=jax.ShapeDtypeStruct((batch, n_total), x.dtype),
            grid_spec=pltpu.PrefetchScalarGridSpec(
                num_scalar_prefetch=0,
                grid=(mt, nt, kt),
                in_specs=[
                    # x: (M, K) tile, same for every N tile.
                    pl.BlockSpec((tm, tk), lambda i, j, k: (i, k)),
                    # weight tile (feat, seq*class).
                    pl.BlockSpec((tk, tn), lambda i, j, k: (k, j)),
                    # lane-dense bias tile, constant across K.
                    pl.BlockSpec((1, tn), lambda i, j, k: (0, j)),
                ],
                # Output block index constant across K -> accumulator pattern.
                out_specs=pl.BlockSpec((tm, tn), lambda i, j, k: (i, j)),
                scratch_shapes=[pltpu.VMEM((tm, tn), jnp.float32)],
            ),
            compiler_params=pltpu.CompilerParams(
                dimension_semantics=("parallel", "parallel", "arbitrary"),
            ),
            cost_estimate=cost,
        )(x, w_flat, b_flat)

    # Untangle (batch, seq*class) -> (seq, batch, class) outside the kernel.
    return jnp.transpose(
        out_flat.reshape(batch, seq_len, class_num), (1, 0, 2))


def init_parabit_params(key, seq_len, feat_dim, class_num, dtype=jnp.float32):
    """Deterministic init mimicking nn.Linear default (uniform +-1/sqrt(fan_in)).
    PyTorch Linear weight is (class_num, feat_dim); we store it transposed as
    (feat_dim, class_num) per bit so the kernel computes x @ W directly."""
    k_w, k_b = jax.random.split(key)
    bound = 1.0 / (feat_dim ** 0.5)
    weights = jax.random.uniform(
        k_w, (seq_len, feat_dim, class_num), dtype=dtype,
        minval=-bound, maxval=bound)
    biases = jax.random.uniform(
        k_b, (seq_len, class_num), dtype=dtype, minval=-bound, maxval=bound)
    return weights, biases


if __name__ == "__main__":
    seq_len, feat_dim, class_num = 8, 32, 8
    batch = 2

    key = jax.random.PRNGKey(0)
    k_x, k_p = jax.random.split(key)

    x = jax.random.normal(k_x, (batch, feat_dim), dtype=jnp.float32)
    weights, biases = init_parabit_params(k_p, seq_len, feat_dim, class_num)

    out = parabit_forward(x, weights, biases)
    out = jax.block_until_ready(out)

    # Reference in plain JAX: stack of x @ W_s + b_s.
    ref = jnp.einsum("bf,sfc->sbc", x, weights) + biases[:, None, :]
    assert out.shape == (seq_len, batch, class_num)
    assert jnp.allclose(out, ref, atol=1e-5, rtol=1e-5)

    print("KERNEL_OK")
</pallas_src>

<mosaic_0001>
module attributes {stable_mosaic.version = 11 : i64} {
  func.func @_parabit_kernel_single_k(%arg0: i32, %arg1: i32, %arg2: memref<2x32xf32, #tpu.memory_space<vmem>>, %arg3: memref<32x64xf32, #tpu.memory_space<vmem>>, %arg4: memref<1x64xf32, #tpu.memory_space<vmem>>, %arg5: memref<2x64xf32, #tpu.memory_space<vmem>>) attributes {dimension_semantics = [#tpu.dimension_semantics<parallel>, #tpu.dimension_semantics<parallel>], iteration_bounds = array<i64: 1, 1>, scalar_prefetch = 0 : i64, scratch_operands = 0 : i64, tpu.core_type = #tpu.core_type<tc>, window_params = [{transform_indices = @transform_0, window_bounds = array<i64: 2, 32>}, {transform_indices = @transform_1, window_bounds = array<i64: 32, 64>}, {transform_indices = @transform_2, window_bounds = array<i64: 1, 64>}, {transform_indices = @transform_3, window_bounds = array<i64: 2, 64>}]} {
    %c0 = arith.constant 0 : index
    %c0_0 = arith.constant 0 : index
    %0 = vector.load %arg2[%c0, %c0_0] : memref<2x32xf32, #tpu.memory_space<vmem>>, vector<2x32xf32>
    %c0_1 = arith.constant 0 : index
    %c0_2 = arith.constant 0 : index
    %1 = vector.load %arg3[%c0_1, %c0_2] : memref<32x64xf32, #tpu.memory_space<vmem>>, vector<32x64xf32>
    %cst = arith.constant dense<0.000000e+00> : vector<2x64xf32>
    %2 = tpu.matmul %0, %1, %cst {dimension_numbers = #tpu.dot_dimension_numbers<[1], [0], [0], [1], [0, 0, 1, 1], [], []>} : vector<2x32xf32>, vector<32x64xf32>, vector<2x64xf32> -> vector<2x64xf32>
    %c0_3 = arith.constant 0 : index
    %c0_4 = arith.constant 0 : index
    %3 = vector.load %arg4[%c0_3, %c0_4] : memref<1x64xf32, #tpu.memory_space<vmem>>, vector<1x64xf32>
    %4 = vector.broadcast %3 : vector<1x64xf32> to vector<2x64xf32>
    %5 = arith.addf %2, %4 : vector<2x64xf32>
    %c0_5 = arith.constant 0 : index
    %c0_6 = arith.constant 0 : index
    %6 = vector.load %arg5[%c0_5, %c0_6] : memref<2x64xf32, #tpu.memory_space<vmem>>, vector<2x64xf32>
    tpu.vector_store %arg5[%c0_5, %c0_6], %5 {strides = array<i32>} : memref<2x64xf32, #tpu.memory_space<vmem>>, vector<2x64xf32>,
    return
  }
  func.func @transform_0(%arg0: i32, %arg1: i32) -> (i32, i32) {
    %c0_i32 = arith.constant 0 : i32
    %c0_i32_0 = arith.constant 0 : i32
    return %arg0, %c0_i32 : i32, i32
  }
  func.func @transform_1(%arg0: i32, %arg1: i32) -> (i32, i32) {
    %c0_i32 = arith.constant 0 : i32
    %c0_i32_0 = arith.constant 0 : i32
    return %c0_i32, %arg1 : i32, i32
  }
  func.func @transform_2(%arg0: i32, %arg1: i32) -> (i32, i32) {
    %c0_i32 = arith.constant 0 : i32
    %c0_i32_0 = arith.constant 0 : i32
    return %c0_i32, %arg1 : i32, i32
  }
  func.func @transform_3(%arg0: i32, %arg1: i32) -> (i32, i32) {
    %c0_i32 = arith.constant 0 : i32
    return %arg0, %arg1 : i32, i32
  }
}

</mosaic_0001>

<llo_original>
// kernel: tpu_custom_call.1
$region0: #{tpu_custom_call.1}
  #allocation0 [shape = 'u32[]', space=smem, size = 0x4, offset = 0x4, fixed_abs, tag = 'smem constant byte address 0x4 - core index']
  #allocation1 [shape = 'u32[144,128]{1,0:T(1,128)}', space=vmem, size = 0x12000, scoped, tag = 'internal scratch']
  %s0 = inlined_call_operand.hbm [shape: f32[2,32], index: 0, kind: input, shape index: {}]
  %s1 = inlined_call_operand.hbm [shape: f32[32,64], index: 1, kind: input, shape index: {}]
  %s2 = inlined_call_operand.vmem [shape: f32[1,64], index: 2, kind: input, shape index: {}]
  %s3 = inlined_call_operand.hbm [shape: f32[2,64], index: 3, kind: output, shape index: {}]
  %s4 = sld [smem:[#allocation0]]
  $region30: #{tpu_custom_call.1} parent=0
    _
  %s6 = ssub.s32 1, %s4
  %s7 = scalar_select 0, %s6, %s4
  $region1: #{tpu_custom_call.1} parent=0
    #allocation2 [shape = 'u8[1024]{0}', space=vmem, size = 0x400, scoped, tag = 'input window, operand 0, single buffered']
    #allocation3 [shape = 's32[1]{0}', space=sflag, size = 0x4, scoped, tag = 'scoped memory for tpu_custom_call.1']
    #allocation4 [shape = 's32[1]{0}', space=sflag, size = 0x4, scoped, tag = 'scoped memory for tpu_custom_call.1']
    #allocation5 [shape = 'u8[16384]{0}', space=vmem, size = 0x4000, scoped, tag = 'input window, operand 1, single buffered']
    #allocation6 [shape = 's32[1]{0}', space=sflag, size = 0x4, scoped, tag = 'scoped memory for tpu_custom_call.1']
    #allocation7 [shape = 'u8[1024]{0}', space=vmem, size = 0x400, scoped, tag = 'output window, operand 0, single buffered']
    %8 = vsyncpa [#allocation3], 0
    %9 = vsyncpa [#allocation6], 0
    %10 = vsyncpa [#allocation4], 0
    // Predicated region
    $region2: #{tpu_custom_call.1} parent=1 // pred_check
      _
    $region3: #{tpu_custom_call.1} parent=1 // pred_check_branch
      %12 = sbr.rel (0) target = $region5
    $region4: #{tpu_custom_call.1} parent=1 // pred_region
      %s14 = ssub.s32 32, 32
      %15 = vsyncadd [#allocation3], %s14
      %s17 = sshll.u32 [#allocation2], 4
      %s18 = int_to_ptr.vmem [resolvable:$true] %s17
      %20 = dma.hbm_to_vmem [thread:$0]  %s0, 32, %s18, [#allocation3]
    $region5: #{tpu_custom_call.1} parent=1 // pred_fallthru
      _
    // Predicated region
    $region6: #{tpu_custom_call.1} parent=1 // pred_check
      _
    $region7: #{tpu_custom_call.1} parent=1 // pred_check_branch
      %22 = sbr.rel (0) target = $region9
    $region8: #{tpu_custom_call.1} parent=1 // pred_region
      %s24 = ssub.s32 512, 512
      %25 = vsyncadd [#allocation6], %s24
      %s26 = sshll.u32 [#allocation5], 4
      %s27 = int_to_ptr.vmem [resolvable:$true] %s26
      %32 = dma.hbm_to_vmem [thread:$0]  %s1, 512, %s27, [#allocation6], 128, 128, 8
    $region9: #{tpu_custom_call.1} parent=1 // pred_fallthru
      _
    // Predicated region
    $region10: #{tpu_custom_call.1} parent=1 // pred_check
      _
    $region11: #{tpu_custom_call.1} parent=1 // pred_check_branch
      %34 = sbr.rel (0) target = $region13
    $region12: #{tpu_custom_call.1} parent=1 // pred_region
      _
    $region13: #{tpu_custom_call.1} parent=1 // pred_fallthru
      _
    // Predicated region
    $region14: #{tpu_custom_call.1} parent=1 // pred_check
      _
    $region15: #{tpu_custom_call.1} parent=1 // pred_check_branch
      %36 = sbr.rel (0) target = $region17
    $region16: #{tpu_custom_call.1} parent=1 // pred_region
      %37 = dma.done [#allocation3], 32
    $region17: #{tpu_custom_call.1} parent=1 // pred_fallthru
      _
    // Predicated region
    $region18: #{tpu_custom_call.1} parent=1 // pred_check
      _
    $region19: #{tpu_custom_call.1} parent=1 // pred_check_branch
      %39 = sbr.rel (0) target = $region21
    $region20: #{tpu_custom_call.1} parent=1 // pred_region
      %40 = dma.done [#allocation6], 512
    $region21: #{tpu_custom_call.1} parent=1 // pred_fallthru
      _
    %v41 = vld [vmem:[#allocation2] sm:$0x3]
    %v42 = vld [vmem:[#allocation5] sm:$0xff]
    %v43 = vld [vmem:[#allocation5 + $0x8] sm:$0xff]
    %v44 = vld [vmem:[#allocation5 + $0x10] sm:$0xff]
    %v45 = vld [vmem:[#allocation5 + $0x18] sm:$0xff]
    %v46 = vld [vmem:[%s2] sm:$0x1]
    %v48 = vlaneseq
    %v49 = vshrl.u32 %v48, 7
    %v50 = vsub.s32 0, %v49
    %v51 = vrot.slane %v46, %v50
    %vm53 = vcmask 261120
    %v55 = vsel %vm53, %v41, 0
    %57 = vmatprep.subr.mxu0 0.0
    %58 = vmatpush1.msra.mxu0 %v42
    %59 = vmatprep.subr.mxu0 0.0
    %60 = vmatpush1.msra.mxu0 %v43
    %61 = vmatprep.subr.mxu0 0.0
    %62 = vmatpush1.msra.mxu0 %v44
    %63 = vmatprep.subr.mxu0 0.0
    %64 = vmatpush1.msra.mxu0 %v45
    %65 = vmatprep.subr.mxu0 0.0
    %66 = vmatpush1.msra.mxu0 0.0
    %67 = vmatprep.subr.mxu0 0.0
    %68 = vmatpush1.msra.mxu0 0.0
    %69 = vmatprep.subr.mxu0 0.0
    %70 = vmatpush1.msra.mxu0 0.0
    %71 = vmatprep.subr.mxu0 0.0
    %72 = vmatpush1.msra.mxu0 0.0
    %73 = vmatprep.subr.mxu0 0.0
    %74 = vmatpush1.msra.mxu0 0.0
    %75 = vmatprep.subr.mxu0 0.0
    %76 = vmatpush1.msra.mxu0 0.0
    %77 = vmatprep.subr.mxu0 0.0
    %78 = vmatpush1.msra.mxu0 0.0
    %79 = vmatprep.subr.mxu0 0.0
    %80 = vmatpush1.msra.mxu0 0.0
    %81 = vmatprep.subr.mxu0 0.0
    %82 = vmatpush1.msra.mxu0 0.0
    %83 = vmatprep.subr.mxu0 0.0
    %84 = vmatpush1.msra.mxu0 0.0
    %85 = vmatprep.subr.mxu0 0.0
    %86 = vmatpush1.msra.mxu0 0.0
    %87 = vmatprep.subr.mxu0 0.0
    %88 = vmatpush1.msra.mxu0 0.0
    %89 = vmatprep.subr.mxu0 0.0
    %90 = vmatpush1.msra.mxu0 0.0
    %91 = vmatprep.subr.mxu0 0.0
    %92 = vmatpush1.msra.mxu0 0.0
    %93 = vmatprep.subr.mxu0 0.0
    %94 = vmatpush1.msra.mxu0 0.0
    %95 = vmatprep.subr.mxu0 0.0
    %96 = vmatpush1.msra.mxu0 0.0
    %97 = vmatprep.subr.mxu0 0.0
    %98 = vmatpush1.msra.mxu0 0.0
    %99 = vmatprep.subr.mxu0 0.0
    %100 = vmatpush1.msra.mxu0 0.0
    %101 = vmatprep.subr.mxu0 0.0
    %102 = vmatpush1.msra.mxu0 0.0
    %103 = vmatprep.subr.mxu0 0.0
    %104 = vmatpush1.msra.mxu0 0.0
    %105 = vmatprep.subr.mxu0 0.0
    %106 = vmatpush1.msra.mxu0 0.0
    %107 = vmatprep.subr.mxu0 0.0
    %108 = vmatpush1.msra.mxu0 0.0
    %109 = vmatprep.subr.mxu0 0.0
    %110 = vmatpush1.msra.mxu0 0.0
    %111 = vmatprep.subr.mxu0 0.0
    %112 = vmatpush1.msra.mxu0 0.0
    %113 = vmatprep.subr.mxu0 0.0
    %114 = vmatpush1.msra.mxu0 0.0
    %115 = vmatprep.subr.mxu0 0.0
    %116 = vmatpush1.msra.mxu0 0.0
    %117 = vmatprep.subr.mxu0 0.0
    %118 = vmatpush1.msra.mxu0 0.0
    %119 = vmatprep.subr.mxu0 0.0
    %120 = vmatpush1.msra.mxu0 0.0
    %121 = vmatprep.mubr.f32.mxu0 0.0
    %122 = vmatmul.mubr.f32.gmra.mrb[0].mxu0 %v55
    %v123 = vpop.f32.mrb[0].mxu0
    %v124 = vadd.f32 %v51, %v123
    %v125 = vpop.f32.mrb[0].mxu0
    %126 = vdwg.mxu0
    %vm127 = vcmask 517120
    %128 = vst.msk [vmem:[#allocation7] sm:$0x3] %vm127, %v124
    // Predicated region
    $region22: #{tpu_custom_call.1} parent=1 // pred_check
      _
    $region23: #{tpu_custom_call.1} parent=1 // pred_check_branch
      %130 = sbr.rel (0) target = $region25
    $region24: #{tpu_custom_call.1} parent=1 // pred_region
      %s132 = ssub.s32 32, 32
      %133 = vsyncadd [#allocation4], %s132
      %s135 = sshll.u32 [#allocation7], 4
      %s136 = int_to_ptr.vmem [resolvable:$true] %s135
      %138 = dma.vmem_to_hbm [thread:$0]  %s136, 32, %s3, [#allocation4]
    $region25: #{tpu_custom_call.1} parent=1 // pred_fallthru
      _
    // Predicated region
    $region26: #{tpu_custom_call.1} parent=1 // pred_check
      _
    $region27: #{tpu_custom_call.1} parent=1 // pred_check_branch
      %140 = sbr.rel (0) target = $region29
    $region28: #{tpu_custom_call.1} parent=1 // pred_region
      %141 = dma.done [#allocation4], 32
    $region29: #{tpu_custom_call.1} parent=1 // pred_fallthru
      _
    %142 = vsyncpa [#allocation3], 1
    %143 = vsyncpa [#allocation6], 1
    %144 = vsyncpa [#allocation4], 1

</llo_original>
